<compile_context>
chip_gen: v7x
topology: tpu7x:2x2x1
jax: 0.10.0
libtpu: 0.0.40
codegen_flags: <defaults>
</compile_context>

<pallas_src>
import jax
import jax.numpy as jnp
from jax import lax
from jax.experimental import pallas as pl
from jax.experimental.pallas import tpu as pltpu

_LANE = 128
_SUBLANE = 8
_DEFAULT_BLOCK_BYTES = 2 * 1024 * 1024  # ~2 MiB per input block (85%+ of HBM roofline)


def _round_up(x, m):
    return ((x + m - 1) // m) * m


def _choose_batch_tile(B, D, itemsize, block_bytes):
    """Rows per block so one lane-padded (TB, D) input block is ~block_bytes."""
    d_padded = _round_up(max(D, 1), _LANE)
    row_bytes = d_padded * itemsize
    tb = max(_SUBLANE, block_bytes // row_bytes)
    if tb >= _LANE:
        tb = (tb // _LANE) * _LANE      # multiple of 128 -> lane-dense output tiles
    else:
        tb = (tb // _SUBLANE) * _SUBLANE
    if tb >= B:
        return int(B)                    # single block covering the whole batch
    return int(tb)


def _triplet_rows_kernel(margin_ref, a_ref, p_ref, n_ref, out_ref):
    a = a_ref[...]
    p = p_ref[...]
    n = n_ref[...]

    # Differences in the input dtype (bf16 stays bf16 through the DMA); squares in f32.
    dp = (a - p).astype(jnp.float32)
    dn = (a - n).astype(jnp.float32)
    d = dp * dp - dn * dn                                # (TB, D) f32

    # Fused reduce-over-D + rows->lanes transpose on the (otherwise idle) MXU:
    #   ones(8, D) contracted with d(TB, D) on the D axis -> (8, TB); row 0 holds
    #   the per-row sums, already lane-major for an unmasked dense store.
    # hi/lo split keeps the sum ~f32-accurate even if the MXU uses bf16 passes.
    ones = jnp.ones((8, d.shape[1]), jnp.float32)
    d_hi = d.astype(jnp.bfloat16).astype(jnp.float32)
    d_lo = d - d_hi
    dims = (((1,), (1,)), ((), ()))
    s8 = (lax.dot_general(ones, d_hi, dims, preferred_element_type=jnp.float32)
          + lax.dot_general(ones, d_lo, dims, preferred_element_type=jnp.float32))
    s = s8[0:1, :]                                       # (1, TB) lane-dense

    margin = margin_ref[0, 0]
    out_ref[...] = jnp.maximum(s + margin, 0.0)          # ReLU, (1, TB)


def triplet_loss(anchor, positive, negative, margin, size_average=True,
                 *, block_bytes=_DEFAULT_BLOCK_BYTES):
    """Pallas TPU implementation of TripletLoss.forward. Returns a scalar."""
    B, D = anchor.shape
    itemsize = jnp.dtype(anchor.dtype).itemsize
    d_padded = _round_up(max(D, 1), _LANE)

    tb = _choose_batch_tile(B, D, itemsize, block_bytes)
    num_blocks = pl.cdiv(B, tb)

    # Corrected VMEM accounting: lane-padded input blocks x 2 pipeline buffers,
    # f32 elementwise temporaries (~3 block-sized), lane-dense output x 2 buffers.
    in_block_bytes = tb * d_padded * itemsize
    vmem_est = 6 * in_block_bytes + 3 * tb * d_padded * 4 + 2 * tb * 4
    vmem_limit = int(min(48 * 1024 * 1024, max(24 * 1024 * 1024, 2 * vmem_est)))

    cost = pl.CostEstimate(
        flops=int(6 * B * D + 2 * B),
        transcendentals=0,
        bytes_accessed=int(3 * B * d_padded * itemsize + 4 * num_blocks * tb),
    )

    margin_arr = jnp.asarray(margin, dtype=jnp.float32).reshape(1, 1)
    row_spec = pl.BlockSpec((tb, D), lambda i: (i, 0))

    losses = pl.pallas_call(
        _triplet_rows_kernel,
        out_shape=jax.ShapeDtypeStruct((num_blocks, tb), jnp.float32),
        grid=(num_blocks,),
        in_specs=[
            pl.BlockSpec(memory_space=pltpu.MemorySpace.SMEM),   # margin scalar
            row_spec,
            row_spec,
            row_spec,
        ],
        out_specs=pl.BlockSpec((1, tb), lambda i: (i, 0)),
        compiler_params=pltpu.CompilerParams(
            dimension_semantics=("parallel",),
            vmem_limit_bytes=vmem_limit,
        ),
        cost_estimate=cost,
    )(margin_arr, anchor, positive, negative)

    # Block i, lane j  <->  original row i*tb + j; tail lanes of a partial last
    # block contain garbage computed from unread rows and are sliced off here.
    losses = losses.reshape(-1)[:B]
    return jnp.mean(losses) if size_average else jnp.sum(losses)


if __name__ == "__main__":
    key = jax.random.PRNGKey(0)
    margin = 1.0

    def ref_loss(a, p, n, size_average):
        dpos = jnp.sum((a - p).astype(jnp.float32) ** 2, axis=1)
        dneg = jnp.sum((a - n).astype(jnp.float32) ** 2, axis=1)
        l = jnp.maximum(dpos - dneg + margin, 0.0)
        return jnp.mean(l) if size_average else jnp.sum(l)

    k1, k2, k3, k4, k5, k6 = jax.random.split(key, 6)

    # Case 1: small demo shape (single block path), mean and sum reductions.
    B, D = 8, 32
    anchor = jax.random.normal(k1, (B, D), dtype=jnp.float32)
    positive = jax.random.normal(k2, (B, D), dtype=jnp.float32)
    negative = jax.random.normal(k3, (B, D), dtype=jnp.float32)

    loss = triplet_loss(anchor, positive, negative, margin, size_average=True)
    jax.block_until_ready(loss)
    assert jnp.allclose(loss, ref_loss(anchor, positive, negative, True),
                        rtol=2e-3, atol=2e-3), loss

    loss_sum = triplet_loss(anchor, positive, negative, margin, size_average=False)
    jax.block_until_ready(loss_sum)
    assert jnp.allclose(loss_sum, ref_loss(anchor, positive, negative, False),
                        rtol=2e-3, atol=2e-3), loss_sum

    # Case 2: force the multi-block path (with a partial last block) at a small
    # shape by shrinking the per-block byte budget.
    B2, D2 = 272, 32
    a2 = jax.random.normal(k4, (B2, D2), dtype=jnp.float32)
    p2 = jax.random.normal(k5, (B2, D2), dtype=jnp.float32)
    n2 = jax.random.normal(k6, (B2, D2), dtype=jnp.float32)

    loss2 = triplet_loss(a2, p2, n2, margin, size_average=True, block_bytes=64 * 1024)
    jax.block_until_ready(loss2)
    assert jnp.allclose(loss2, ref_loss(a2, p2, n2, True), rtol=2e-3, atol=2e-3), loss2

    print("KERNEL_OK")
</pallas_src>

<mosaic_0001>
module attributes {stable_mosaic.version = 11 : i64} {
  func.func @_triplet_rows_kernel(%arg0: i32, %arg1: memref<1x1xf32, #tpu.memory_space<smem>>, %arg2: memref<8x32xf32, #tpu.memory_space<vmem>>, %arg3: memref<8x32xf32, #tpu.memory_space<vmem>>, %arg4: memref<8x32xf32, #tpu.memory_space<vmem>>, %arg5: memref<1x8xf32, #tpu.memory_space<vmem>>) attributes {dimension_semantics = [#tpu.dimension_semantics<parallel>], iteration_bounds = array<i64: 1>, scalar_prefetch = 0 : i64, scratch_operands = 0 : i64, tpu.core_type = #tpu.core_type<tc>, window_params = [{transform_indices = @transform_0, window_bounds = array<i64: 1, 1>}, {transform_indices = @transform_1, window_bounds = array<i64: 8, 32>}, {transform_indices = @transform_2, window_bounds = array<i64: 8, 32>}, {transform_indices = @transform_3, window_bounds = array<i64: 8, 32>}, {transform_indices = @transform_4, window_bounds = array<i64: 1, 8>}]} {
    %c0 = arith.constant 0 : index
    %c0_0 = arith.constant 0 : index
    %0 = vector.load %arg2[%c0, %c0_0] : memref<8x32xf32, #tpu.memory_space<vmem>>, vector<8x32xf32>
    %c0_1 = arith.constant 0 : index
    %c0_2 = arith.constant 0 : index
    %1 = vector.load %arg3[%c0_1, %c0_2] : memref<8x32xf32, #tpu.memory_space<vmem>>, vector<8x32xf32>
    %c0_3 = arith.constant 0 : index
    %c0_4 = arith.constant 0 : index
    %2 = vector.load %arg4[%c0_3, %c0_4] : memref<8x32xf32, #tpu.memory_space<vmem>>, vector<8x32xf32>
    %3 = arith.subf %0, %1 : vector<8x32xf32>
    %4 = arith.subf %0, %2 : vector<8x32xf32>
    %5 = arith.mulf %3, %3 : vector<8x32xf32>
    %6 = arith.mulf %4, %4 : vector<8x32xf32>
    %7 = arith.subf %5, %6 : vector<8x32xf32>
    %cst = arith.constant 1.000000e+00 : f32
    %8 = vector.broadcast %cst : f32 to vector<8x32xf32>
    %9 = arith.truncf %7 : vector<8x32xf32> to vector<8x32xbf16>
    %10 = arith.extf %9 : vector<8x32xbf16> to vector<8x32xf32>
    %11 = arith.subf %7, %10 : vector<8x32xf32>
    %cst_5 = arith.constant dense<0.000000e+00> : vector<8x8xf32>
    %12 = tpu.matmul %8, %10, %cst_5 {dimension_numbers = #tpu.dot_dimension_numbers<[1], [1], [0], [0], [0, 0, 1, 0], [], []>} : vector<8x32xf32>, vector<8x32xf32>, vector<8x8xf32> -> vector<8x8xf32>
    %cst_6 = arith.constant dense<0.000000e+00> : vector<8x8xf32>
    %13 = tpu.matmul %8, %11, %cst_6 {dimension_numbers = #tpu.dot_dimension_numbers<[1], [1], [0], [0], [0, 0, 1, 0], [], []>} : vector<8x32xf32>, vector<8x32xf32>, vector<8x8xf32> -> vector<8x8xf32>
    %14 = arith.addf %12, %13 : vector<8x8xf32>
    %15 = vector.extract_strided_slice %14 {offsets = [0, 0], sizes = [1, 8], strides = [1, 1]} : vector<8x8xf32> to vector<1x8xf32>
    %c0_7 = arith.constant 0 : index
    %c0_8 = arith.constant 0 : index
    %16 = memref.load %arg1[%c0_7, %c0_8] : memref<1x1xf32, #tpu.memory_space<smem>>
    %17 = vector.broadcast %16 : f32 to vector<1x8xf32>
    %18 = arith.addf %15, %17 : vector<1x8xf32>
    %cst_9 = arith.constant 0.000000e+00 : f32
    %19 = vector.broadcast %cst_9 : f32 to vector<1x8xf32>
    %20 = arith.maximumf %18, %19 : vector<1x8xf32>
    %c0_10 = arith.constant 0 : index
    %c0_11 = arith.constant 0 : index
    %21 = vector.load %arg5[%c0_10, %c0_11] : memref<1x8xf32, #tpu.memory_space<vmem>>, vector<1x8xf32>
    tpu.vector_store %arg5[%c0_10, %c0_11], %20 {strides = array<i32>} : memref<1x8xf32, #tpu.memory_space<vmem>>, vector<1x8xf32>,
    return
  }
  func.func @transform_0(%arg0: i32) -> (i32, i32) {
    %c0_i32 = arith.constant 0 : i32
    %c0_i32_0 = arith.constant 0 : i32
    %c0_i32_1 = arith.constant 0 : i32
    return %c0_i32, %c0_i32_0 : i32, i32
  }
  func.func @transform_1(%arg0: i32) -> (i32, i32) {
    %c0_i32 = arith.constant 0 : i32
    %c0_i32_0 = arith.constant 0 : i32
    return %arg0, %c0_i32 : i32, i32
  }
  func.func @transform_2(%arg0: i32) -> (i32, i32) {
    %c0_i32 = arith.constant 0 : i32
    %c0_i32_0 = arith.constant 0 : i32
    return %arg0, %c0_i32 : i32, i32
  }
  func.func @transform_3(%arg0: i32) -> (i32, i32) {
    %c0_i32 = arith.constant 0 : i32
    %c0_i32_0 = arith.constant 0 : i32
    return %arg0, %c0_i32 : i32, i32
  }
  func.func @transform_4(%arg0: i32) -> (i32, i32) {
    %c0_i32 = arith.constant 0 : i32
    %c0_i32_0 = arith.constant 0 : i32
    return %arg0, %c0_i32 : i32, i32
  }
}

</mosaic_0001>

<llo_original>
// kernel: tpu_custom_call.1
$region0: #{tpu_custom_call.1}
  #allocation0 [shape = 'u32[]', space=smem, size = 0x4, offset = 0x4, fixed_abs, tag = 'smem constant byte address 0x4 - core index']
  #allocation1 [shape = 'u32[144,128]{1,0:T(1,128)}', space=vmem, size = 0x12000, scoped, tag = 'internal scratch']
  #allocation2 [shape = 'f32[1,1]{1,0:T(1,128)S(6)}', space=smem, size = 0x200, scoped, tag = 'scoped memory for tpu_custom_call.1']
  %s0 = inlined_call_operand.<no memory space> [shape: f32[1,1], index: 0, kind: input, shape index: {}]
  %s1 = inlined_call_operand.hbm [shape: f32[8,32], index: 1, kind: input, shape index: {}]
  %s2 = inlined_call_operand.hbm [shape: f32[8,32], index: 2, kind: input, shape index: {}]
  %s3 = inlined_call_operand.vmem [shape: f32[8,32], index: 3, kind: input, shape index: {}]
  %s4 = inlined_call_operand.hbm [shape: f32[1,8], index: 4, kind: output, shape index: {}]
  %s5 = sld [smem:[#allocation0]]
  $region34: #{tpu_custom_call.1} parent=0
    _
  %s7 = ssub.s32 1, %s5
  %s8 = scalar_select 0, %s7, %s5
  %9 = sst [smem:[#allocation2]] %s0
  $region1: #{tpu_custom_call.1} parent=0
    #allocation3 [shape = 'u8[4096]{0}', space=vmem, size = 0x1000, scoped, tag = 'input window, operand 1, single buffered']
    #allocation4 [shape = 's32[1]{0}', space=sflag, size = 0x4, scoped, tag = 'scoped memory for tpu_custom_call.1']
    #allocation5 [shape = 's32[1]{0}', space=sflag, size = 0x4, scoped, tag = 'scoped memory for tpu_custom_call.1']
    #allocation6 [shape = 'u8[4096]{0}', space=vmem, size = 0x1000, scoped, tag = 'input window, operand 2, single buffered']
    #allocation7 [shape = 's32[1]{0}', space=sflag, size = 0x4, scoped, tag = 'scoped memory for tpu_custom_call.1']
    #allocation8 [shape = 'u8[512]{0}', space=vmem, size = 0x400, scoped, tag = 'output window, operand 0, single buffered']
    %10 = vsyncpa [#allocation4], 0
    %11 = vsyncpa [#allocation7], 0
    %12 = vsyncpa [#allocation5], 0
    // Predicated region
    $region2: #{tpu_custom_call.1} parent=1 // pred_check
      _
    $region3: #{tpu_custom_call.1} parent=1 // pred_check_branch
      %14 = sbr.rel (0) target = $region5
    $region4: #{tpu_custom_call.1} parent=1 // pred_region
      _
    $region5: #{tpu_custom_call.1} parent=1 // pred_fallthru
      _
    // Predicated region
    $region6: #{tpu_custom_call.1} parent=1 // pred_check
      _
    $region7: #{tpu_custom_call.1} parent=1 // pred_check_branch
      %16 = sbr.rel (0) target = $region9
    $region8: #{tpu_custom_call.1} parent=1 // pred_region
      %s18 = ssub.s32 128, 128
      %19 = vsyncadd [#allocation4], %s18
      %s21 = sshll.u32 [#allocation3], 4
      %s22 = int_to_ptr.vmem [resolvable:$true] %s21
      %24 = dma.hbm_to_vmem [thread:$0]  %s1, 128, %s22, [#allocation4]
    $region9: #{tpu_custom_call.1} parent=1 // pred_fallthru
      _
    // Predicated region
    $region10: #{tpu_custom_call.1} parent=1 // pred_check
      _
    $region11: #{tpu_custom_call.1} parent=1 // pred_check_branch
      %26 = sbr.rel (0) target = $region13
    $region12: #{tpu_custom_call.1} parent=1 // pred_region
      %s28 = ssub.s32 128, 128
      %29 = vsyncadd [#allocation7], %s28
      %s31 = sshll.u32 [#allocation6], 4
      %s32 = int_to_ptr.vmem [resolvable:$true] %s31
      %34 = dma.hbm_to_vmem [thread:$0]  %s2, 128, %s32, [#allocation7]
    $region13: #{tpu_custom_call.1} parent=1 // pred_fallthru
      _
    // Predicated region
    $region14: #{tpu_custom_call.1} parent=1 // pred_check
      _
    $region15: #{tpu_custom_call.1} parent=1 // pred_check_branch
      %36 = sbr.rel (0) target = $region17
    $region16: #{tpu_custom_call.1} parent=1 // pred_region
      _
    $region17: #{tpu_custom_call.1} parent=1 // pred_fallthru
      _
    // Predicated region
    $region18: #{tpu_custom_call.1} parent=1 // pred_check
      _
    $region19: #{tpu_custom_call.1} parent=1 // pred_check_branch
      %38 = sbr.rel (0) target = $region21
    $region20: #{tpu_custom_call.1} parent=1 // pred_region
      %39 = dma.done [#allocation4], 128
    $region21: #{tpu_custom_call.1} parent=1 // pred_fallthru
      _
    // Predicated region
    $region22: #{tpu_custom_call.1} parent=1 // pred_check
      _
    $region23: #{tpu_custom_call.1} parent=1 // pred_check_branch
      %41 = sbr.rel (0) target = $region25
    $region24: #{tpu_custom_call.1} parent=1 // pred_region
      %42 = dma.done [#allocation7], 128
    $region25: #{tpu_custom_call.1} parent=1 // pred_fallthru
      _
    %v43 = vld [vmem:[#allocation3] sm:$0xff]
    %v44 = vld [vmem:[#allocation6] sm:$0xff]
    %v45 = vld [vmem:[%s3] sm:$0xff]
    %v46 = vsub.f32 %v43, %v44
    %v47 = vsub.f32 %v43, %v45
    %v48 = vmul.f32 %v46, %v46
    %v49 = vmul.f32 %v47, %v47
    %v50 = vsub.f32 %v48, %v49
    %v51 = vpack.c.bf16 %v50, %v50
    %v52 = vunpack.c.l.bf16 %v51
    %v53 = vsub.f32 %v50, %v52
    %vm54 = vcmask 261120
    %v56 = vsel %vm54, 1.0, 0
    %v59 = vsel %vm54, %v53, 0
    %61 = vmatprep.subr.mxu0 0.0
    %62 = vmatpush1.xpose.msra.mxu0 %v59
    %63 = vmatprep.subr.mxu0 0.0
    %64 = vmatpush1.xpose.msra.mxu0 0.0
    %65 = vmatprep.subr.mxu0 0.0
    %66 = vmatpush1.xpose.msra.mxu0 0.0
    %67 = vmatprep.subr.mxu0 0.0
    %68 = vmatpush1.xpose.msra.mxu0 0.0
    %69 = vmatprep.subr.mxu0 0.0
    %70 = vmatpush1.xpose.msra.mxu0 0.0
    %71 = vmatprep.subr.mxu0 0.0
    %72 = vmatpush1.xpose.msra.mxu0 0.0
    %73 = vmatprep.subr.mxu0 0.0
    %74 = vmatpush1.xpose.msra.mxu0 0.0
    %75 = vmatprep.subr.mxu0 0.0
    %76 = vmatpush1.xpose.msra.mxu0 0.0
    %77 = vmatprep.subr.mxu0 0.0
    %78 = vmatpush1.xpose.msra.mxu0 0.0
    %79 = vmatprep.subr.mxu0 0.0
    %80 = vmatpush1.xpose.msra.mxu0 0.0
    %81 = vmatprep.subr.mxu0 0.0
    %82 = vmatpush1.xpose.msra.mxu0 0.0
    %83 = vmatprep.subr.mxu0 0.0
    %84 = vmatpush1.xpose.msra.mxu0 0.0
    %85 = vmatprep.subr.mxu0 0.0
    %86 = vmatpush1.xpose.msra.mxu0 0.0
    %87 = vmatprep.subr.mxu0 0.0
    %88 = vmatpush1.xpose.msra.mxu0 0.0
    %89 = vmatprep.subr.mxu0 0.0
    %90 = vmatpush1.xpose.msra.mxu0 0.0
    %91 = vmatprep.subr.mxu0 0.0
    %92 = vmatpush1.xpose.msra.mxu0 0.0
    %93 = vmatprep.subr.mxu0 0.0
    %94 = vmatpush1.xpose.msra.mxu0 0.0
    %95 = vmatprep.subr.mxu0 0.0
    %96 = vmatpush1.xpose.msra.mxu0 0.0
    %97 = vmatprep.subr.mxu0 0.0
    %98 = vmatpush1.xpose.msra.mxu0 0.0
    %99 = vmatprep.subr.mxu0 0.0
    %100 = vmatpush1.xpose.msra.mxu0 0.0
    %101 = vmatprep.subr.mxu0 0.0
    %102 = vmatpush1.xpose.msra.mxu0 0.0
    %103 = vmatprep.subr.mxu0 0.0
    %104 = vmatpush1.xpose.msra.mxu0 0.0
    %105 = vmatprep.subr.mxu0 0.0
    %106 = vmatpush1.xpose.msra.mxu0 0.0
    %107 = vmatprep.subr.mxu0 0.0
    %108 = vmatpush1.xpose.msra.mxu0 0.0
    %109 = vmatprep.subr.mxu0 0.0
    %110 = vmatpush1.xpose.msra.mxu0 0.0
    %111 = vmatprep.subr.mxu0 0.0
    %112 = vmatpush1.xpose.msra.mxu0 0.0
    %113 = vmatprep.subr.mxu0 0.0
    %114 = vmatpush1.xpose.msra.mxu0 0.0
    %115 = vmatprep.subr.mxu0 0.0
    %116 = vmatpush1.xpose.msra.mxu0 0.0
    %117 = vmatprep.subr.mxu0 0.0
    %118 = vmatpush1.xpose.msra.mxu0 0.0
    %119 = vmatprep.subr.mxu0 0.0
    %120 = vmatpush1.xpose.msra.mxu0 0.0
    %121 = vmatprep.subr.mxu0 0.0
    %122 = vmatpush1.xpose.msra.mxu0 0.0
    %123 = vmatprep.subr.mxu0 0.0
    %124 = vmatpush1.xpose.msra.mxu0 0.0
    %125 = vmatprep.mubr.f32.mxu0 0.0
    %126 = vmatmul.mubr.f32.gmra.mrb[0].mxu0 %v56
    %v127 = vpop.f32.mrb[0].mxu0
    %v128 = vadd.f32 0.0, %v127
    %v129 = vpop.f32.mrb[0].mxu0
    %130 = vdwg.mxu0
    %v132 = vsel %vm54, %v52, 0
    %134 = vmatprep.subr.mxu0 0.0
    %135 = vmatpush1.xpose.msra.mxu0 %v132
    %136 = vmatprep.subr.mxu0 0.0
    %137 = vmatpush1.xpose.msra.mxu0 0.0
    %138 = vmatprep.subr.mxu0 0.0
    %139 = vmatpush1.xpose.msra.mxu0 0.0
    %140 = vmatprep.subr.mxu0 0.0
    %141 = vmatpush1.xpose.msra.mxu0 0.0
    %142 = vmatprep.subr.mxu0 0.0
    %143 = vmatpush1.xpose.msra.mxu0 0.0
    %144 = vmatprep.subr.mxu0 0.0
    %145 = vmatpush1.xpose.msra.mxu0 0.0
    %146 = vmatprep.subr.mxu0 0.0
    %147 = vmatpush1.xpose.msra.mxu0 0.0
    %148 = vmatprep.subr.mxu0 0.0
    %149 = vmatpush1.xpose.msra.mxu0 0.0
    %150 = vmatprep.subr.mxu0 0.0
    %151 = vmatpush1.xpose.msra.mxu0 0.0
    %152 = vmatprep.subr.mxu0 0.0
    %153 = vmatpush1.xpose.msra.mxu0 0.0
    %154 = vmatprep.subr.mxu0 0.0
    %155 = vmatpush1.xpose.msra.mxu0 0.0
    %156 = vmatprep.subr.mxu0 0.0
    %157 = vmatpush1.xpose.msra.mxu0 0.0
    %158 = vmatprep.subr.mxu0 0.0
    %159 = vmatpush1.xpose.msra.mxu0 0.0
    %160 = vmatprep.subr.mxu0 0.0
    %161 = vmatpush1.xpose.msra.mxu0 0.0
    %162 = vmatprep.subr.mxu0 0.0
    %163 = vmatpush1.xpose.msra.mxu0 0.0
    %164 = vmatprep.subr.mxu0 0.0
    %165 = vmatpush1.xpose.msra.mxu0 0.0
    %166 = vmatprep.subr.mxu0 0.0
    %167 = vmatpush1.xpose.msra.mxu0 0.0
    %168 = vmatprep.subr.mxu0 0.0
    %169 = vmatpush1.xpose.msra.mxu0 0.0
    %170 = vmatprep.subr.mxu0 0.0
    %171 = vmatpush1.xpose.msra.mxu0 0.0
    %172 = vmatprep.subr.mxu0 0.0
    %173 = vmatpush1.xpose.msra.mxu0 0.0
    %174 = vmatprep.subr.mxu0 0.0
    %175 = vmatpush1.xpose.msra.mxu0 0.0
    %176 = vmatprep.subr.mxu0 0.0
    %177 = vmatpush1.xpose.msra.mxu0 0.0
    %178 = vmatprep.subr.mxu0 0.0
    %179 = vmatpush1.xpose.msra.mxu0 0.0
    %180 = vmatprep.subr.mxu0 0.0
    %181 = vmatpush1.xpose.msra.mxu0 0.0
    %182 = vmatprep.subr.mxu0 0.0
    %183 = vmatpush1.xpose.msra.mxu0 0.0
    %184 = vmatprep.subr.mxu0 0.0
    %185 = vmatpush1.xpose.msra.mxu0 0.0
    %186 = vmatprep.subr.mxu0 0.0
    %187 = vmatpush1.xpose.msra.mxu0 0.0
    %188 = vmatprep.subr.mxu0 0.0
    %189 = vmatpush1.xpose.msra.mxu0 0.0
    %190 = vmatprep.subr.mxu0 0.0
    %191 = vmatpush1.xpose.msra.mxu0 0.0
    %192 = vmatprep.subr.mxu0 0.0
    %193 = vmatpush1.xpose.msra.mxu0 0.0
    %194 = vmatprep.subr.mxu0 0.0
    %195 = vmatpush1.xpose.msra.mxu0 0.0
    %196 = vmatprep.subr.mxu0 0.0
    %197 = vmatpush1.xpose.msra.mxu0 0.0
    %198 = vmatprep.mubr.f32.mxu0 0.0
    %199 = vmatmul.mubr.f32.gmra.mrb[0].mxu0 %v56
    %v200 = vpop.f32.mrb[0].mxu0
    %v201 = vadd.f32 %v128, %v200
    %v202 = vpop.f32.mrb[0].mxu0
    %203 = vdwg.mxu0
    %s204 = sld [smem:[#allocation2]]
    %v205 = vstv %s204
    %v206 = vadd.f32 %v201, %v205
    %v207 = vmax.f32 %v206, 0.0
    %vm208 = vcmask 57344
    %209 = vst.msk [vmem:[#allocation8] sm:$0x1] %vm208, %v207
    // Predicated region
    $region26: #{tpu_custom_call.1} parent=1 // pred_check
      _
    $region27: #{tpu_custom_call.1} parent=1 // pred_check_branch
      %211 = sbr.rel (0) target = $region29
    $region28: #{tpu_custom_call.1} parent=1 // pred_region
      %s213 = ssub.s32 16, 16
      %214 = vsyncadd [#allocation5], %s213
      %s216 = sshll.u32 [#allocation8], 4
      %s217 = int_to_ptr.vmem [resolvable:$true] %s216
      %219 = dma.vmem_to_hbm [thread:$0]  %s217, 16, %s4, [#allocation5]
    $region29: #{tpu_custom_call.1} parent=1 // pred_fallthru
      _
    // Predicated region
    $region30: #{tpu_custom_call.1} parent=1 // pred_check
      _
    $region31: #{tpu_custom_call.1} parent=1 // pred_check_branch
      %221 = sbr.rel (0) target = $region33
    $region32: #{tpu_custom_call.1} parent=1 // pred_region
      %222 = dma.done [#allocation5], 16
    $region33: #{tpu_custom_call.1} parent=1 // pred_fallthru
      _
    %223 = vsyncpa [#allocation4], 1
    %224 = vsyncpa [#allocation7], 1
    %225 = vsyncpa [#allocation5], 1

</llo_original>
